<compile_context>
chip_gen: v5e
topology: v5e:2x2
jax: 0.10.0
libtpu: 0.0.40
codegen_flags: <defaults>
</compile_context>

<pallas_src>
import math

import jax
import jax.numpy as jnp
from jax.experimental import pallas as pl
from jax.experimental.pallas import tpu as pltpu

_MAX_TB = 256                 # sublane-tile rows (multiple of 8)
_MAX_TF = 2048                # lane-tile cols (multiple of 128) -> 2 MiB f32/tile
_VMEM_LIMIT = 32 * 1024 * 1024  # explicit scoped-VMEM budget (safe on v5e/v6e/v7x)


def _copy_kernel(x_ref, o_ref):
    # Lane-dense identity copy of one (tb, tf) tile; the flatten itself is a
    # metadata-only reshape done in the wrapper.
    o_ref[...] = x_ref[...]


def _pick_lane_width(total):
    """Largest multiple of 128 <= _MAX_TF that divides `total`, preferring a
    choice whose row count (total // tf) is sublane-dense (multiple of 8)."""
    upper = min(_MAX_TF, total)
    upper -= upper % 128
    fallback = None
    for tf in range(upper, 127, -128):
        if total % tf == 0:
            if (total // tf) % 8 == 0:
                return tf
            if fallback is None:
                fallback = tf
    return fallback


def _pick_row_tile(rows):
    """Row-tile that divides `rows` when possible (no masked edge stores)."""
    if rows <= _MAX_TB:
        return rows  # full-extent block is always legal per the (8,128) rule
    for tb in range(_MAX_TB, 7, -8):
        if rows % tb == 0:
            return tb
    return _MAX_TB  # rare fallback: masked edge on the sublane axis only


def _materialized_copy(x2: jax.Array) -> jax.Array:
    """Roofline HBM copy of the already-flattened (B, F) array."""
    batch, feat = x2.shape
    total = batch * feat
    if total == 0:
        return x2

    tf = _pick_lane_width(total)
    if tf is None:
        # total bytes not lane-divisible: a lane-dense copy is impossible and
        # the reshape alone already implements the op exactly.
        return x2

    rows = total // tf
    tb = _pick_row_tile(rows)

    # Metadata-only restaging into a sublane/lane-dense shape regardless of B.
    flat = jnp.reshape(x2, (rows, tf))
    nbytes = total * x2.dtype.itemsize

    out = pl.pallas_call(
        _copy_kernel,
        out_shape=jax.ShapeDtypeStruct((rows, tf), x2.dtype),
        grid=(pl.cdiv(rows, tb),),
        in_specs=[pl.BlockSpec((tb, tf), lambda i: (i, 0))],
        out_specs=pl.BlockSpec((tb, tf), lambda i: (i, 0)),
        compiler_params=pltpu.CompilerParams(
            dimension_semantics=("parallel",),
            vmem_limit_bytes=_VMEM_LIMIT,
        ),
        cost_estimate=pl.CostEstimate(
            flops=0, transcendentals=0, bytes_accessed=2 * nbytes),
    )(flat)

    return jnp.reshape(out, (batch, feat))


def flatten_layer(x: jax.Array, *, materialize: bool = False) -> jax.Array:
    """Pallas equivalent of FlattenLayer.forward: (B, ...) -> (B, prod(...)).

    By default this is the zero-cost metadata reshape (the correct answer per
    the perf review).  Pass materialize=True to force a fresh HBM copy via the
    tiled Pallas kernel.
    """
    batch = x.shape[0]
    feat = math.prod(x.shape[1:]) if x.ndim > 1 else 1

    # Row-major reshape == torch.Tensor.view on a contiguous tensor; XLA
    # lowers this to a metadata-only bitcast (zero HBM traffic).
    x2 = jnp.reshape(x, (batch, feat))
    if not materialize:
        return x2
    return _materialized_copy(x2)


if __name__ == "__main__":
    # FlattenLayer has no parameters; build a deterministic NCHW input.
    key = jax.random.PRNGKey(0)
    x = jax.random.normal(key, (2, 4, 16, 16), dtype=jnp.float32)
    ref = x.reshape(x.shape[0], -1)

    # Default path: zero-copy metadata reshape (the recommended fast path).
    y0 = flatten_layer(x)
    jax.block_until_ready(y0)
    assert y0.shape == (2, 4 * 16 * 16), y0.shape
    assert y0.dtype == x.dtype
    assert jnp.array_equal(y0, ref), "mismatch vs reference flatten (view path)"

    # Explicit materialization path: exercises the Pallas copy kernel once.
    y1 = flatten_layer(x, materialize=True)
    jax.block_until_ready(y1)
    assert y1.shape == (2, 4 * 16 * 16), y1.shape
    assert y1.dtype == x.dtype
    assert jnp.array_equal(y1, ref), "mismatch vs reference flatten (kernel path)"

    print("KERNEL_OK")
</pallas_src>

<mosaic_0001>
module attributes {stable_mosaic.version = 11 : i64} {
  func.func @_copy_kernel(%arg0: i32, %arg1: memref<8x256xf32, #tpu.memory_space<vmem>>, %arg2: memref<8x256xf32, #tpu.memory_space<vmem>>) attributes {dimension_semantics = [#tpu.dimension_semantics<parallel>], iteration_bounds = array<i64: 1>, scalar_prefetch = 0 : i64, scratch_operands = 0 : i64, tpu.core_type = #tpu.core_type<tc>, window_params = [{transform_indices = @transform_0, window_bounds = array<i64: 8, 256>}, {transform_indices = @transform_1, window_bounds = array<i64: 8, 256>}]} {
    %c0 = arith.constant 0 : index
    %c0_0 = arith.constant 0 : index
    %0 = vector.load %arg1[%c0, %c0_0] : memref<8x256xf32, #tpu.memory_space<vmem>>, vector<8x256xf32>
    %c0_1 = arith.constant 0 : index
    %c0_2 = arith.constant 0 : index
    %1 = vector.load %arg2[%c0_1, %c0_2] : memref<8x256xf32, #tpu.memory_space<vmem>>, vector<8x256xf32>
    tpu.vector_store %arg2[%c0_1, %c0_2], %0 {strides = array<i32>} : memref<8x256xf32, #tpu.memory_space<vmem>>, vector<8x256xf32>,
    return
  }
  func.func @transform_0(%arg0: i32) -> (i32, i32) {
    %c0_i32 = arith.constant 0 : i32
    %c0_i32_0 = arith.constant 0 : i32
    return %arg0, %c0_i32 : i32, i32
  }
  func.func @transform_1(%arg0: i32) -> (i32, i32) {
    %c0_i32 = arith.constant 0 : i32
    %c0_i32_0 = arith.constant 0 : i32
    return %arg0, %c0_i32 : i32, i32
  }
}

</mosaic_0001>

<llo_original>
// kernel: tpu_custom_call.1
$region0: #{tpu_custom_call.1}
  #allocation0 [shape = 'u32[]', space=smem, size = 0x4, offset = 0x4, fixed_abs, tag = 'smem constant byte address 0x4 - core index']
  #allocation1 [shape = 'u32[72,128]{1,0:T(1,128)}', space=vmem, size = 0x9000, scoped, tag = 'internal scratch']
  %s0 = inlined_call_operand.hbm [shape: f32[8,256], index: 0, kind: input, shape index: {}]
  %s1 = inlined_call_operand.hbm [shape: f32[8,256], index: 1, kind: output, shape index: {}]
  %s2 = sld [smem:[#allocation0]]
  $region18: #{tpu_custom_call.1} parent=0
    _
  %s4 = ssub.s32 1, %s2
  %s5 = scalar_select 0, %s4, %s2
  $region1: #{tpu_custom_call.1} parent=0
    #allocation2 [shape = 'u8[8192]{0}', space=vmem, size = 0x2000, scoped, tag = 'input window, operand 0, single buffered']
    #allocation3 [shape = 's32[1]{0}', space=sflag, size = 0x4, scoped, tag = 'scoped memory for tpu_custom_call.1']
    #allocation4 [shape = 's32[1]{0}', space=sflag, size = 0x4, scoped, tag = 'scoped memory for tpu_custom_call.1']
    #allocation5 [shape = 'u8[8192]{0}', space=vmem, size = 0x2000, scoped, tag = 'output window, operand 0, single buffered']
    %6 = vsyncpa [#allocation3], 0
    %7 = vsyncpa [#allocation4], 0
    // Predicated region
    $region2: #{tpu_custom_call.1} parent=1 // pred_check
      _
    $region3: #{tpu_custom_call.1} parent=1 // pred_check_branch
      %9 = sbr.rel (0) target = $region5
    $region4: #{tpu_custom_call.1} parent=1 // pred_region
      %11 = vsyncadd [#allocation3], 0
      %s13 = sshll.u32 %s0, 4
      %s14 = int_to_ptr.hbm [resolvable:$true] %s13
      %s15 = sshll.u32 [#allocation2], 4
      %s16 = int_to_ptr.vmem [resolvable:$true] %s15
      %18 = dma.hbm_to_vmem [thread:$0]  %s14, 256, %s16, [#allocation3]
    $region5: #{tpu_custom_call.1} parent=1 // pred_fallthru
      _
    // Predicated region
    $region6: #{tpu_custom_call.1} parent=1 // pred_check
      _
    $region7: #{tpu_custom_call.1} parent=1 // pred_check_branch
      %20 = sbr.rel (0) target = $region9
    $region8: #{tpu_custom_call.1} parent=1 // pred_region
      %22 = dma.done [#allocation3], 256
    $region9: #{tpu_custom_call.1} parent=1 // pred_fallthru
      _
    %v23 = vld [vmem:[#allocation2] sm:$0xff]
    %v24 = vld [vmem:[#allocation2 + $0x8] sm:$0xff]
    %25 = vst [vmem:[#allocation5] sm:$0xff] %v23
    %26 = vst [vmem:[#allocation5 + $0x8] sm:$0xff] %v24
    // Predicated region
    $region10: #{tpu_custom_call.1} parent=1 // pred_check
      _
    $region11: #{tpu_custom_call.1} parent=1 // pred_check_branch
      %28 = sbr.rel (0) target = $region13
    $region12: #{tpu_custom_call.1} parent=1 // pred_region
      %30 = vsyncadd [#allocation4], 0
      %s32 = sshll.u32 [#allocation5], 4
      %s33 = int_to_ptr.vmem [resolvable:$true] %s32
      %s34 = sshll.u32 %s1, 4
      %s35 = int_to_ptr.hbm [resolvable:$true] %s34
      %37 = dma.vmem_to_hbm [thread:$0]  %s33, 256, %s35, [#allocation4]
    $region13: #{tpu_custom_call.1} parent=1 // pred_fallthru
      _
    // Predicated region
    $region14: #{tpu_custom_call.1} parent=1 // pred_check
      _
    $region15: #{tpu_custom_call.1} parent=1 // pred_check_branch
      %39 = sbr.rel (0) target = $region17
    $region16: #{tpu_custom_call.1} parent=1 // pred_region
      %41 = dma.done [#allocation4], 256
    $region17: #{tpu_custom_call.1} parent=1 // pred_fallthru
      _
    %42 = vsyncpa [#allocation3], 1
    %43 = vsyncpa [#allocation4], 1

</llo_original>
